<compile_context>
chip_gen: v7x
topology: tpu7x:2x2x1
jax: 0.10.0
libtpu: 0.0.40
codegen_flags: <defaults>
</compile_context>

<pallas_src>
import jax
import jax.numpy as jnp
from jax.experimental import pallas as pl
from jax.experimental.pallas import tpu as pltpu


def model_kernel(w_ref, b_ref, x_ref, o_ref):
    # w_ref: (out_f=2, in_f=2) f32 in SMEM (PyTorch nn.Linear layout)
    # b_ref: (out_f=2,)        f32 in SMEM
    # x_ref: (in_f=2,  TB)     f32 in VMEM  -- feature-major, batch on lanes
    # o_ref: (out_f=2, TB)     f32 in VMEM
    x0 = x_ref[0:1, :]                                   # (1, TB) input feature 0
    x1 = x_ref[1:2, :]                                   # (1, TB) input feature 1

    # ---- Linear(2, 2) as scalar-broadcast FMAs on the VPU (no MXU, K=2) ----
    r0 = x0 * w_ref[0, 0] + x1 * w_ref[0, 1] + b_ref[0]  # (1, TB) out feature 0
    r1 = x0 * w_ref[1, 0] + x1 * w_ref[1, 1] + b_ref[1]  # (1, TB) out feature 1
    v1 = jnp.concatenate([r0, r1], axis=0)               # (2, TB) f32

    # ---- Literal fuzz expression (elementwise-broadcast interpretation) ----
    #   clamp(min(0, max(6, v1 + 3)), 0, 6) == 0 for all finite v1.
    #   Kept (not constant-folded) so NaN/Inf propagate like the reference;
    #   it is a handful of free VPU ops at any size.
    inner = jnp.minimum(jnp.float32(0.0),
                        jnp.maximum(jnp.float32(6.0), v1 + 3.0))
    gate = jnp.clip(inner, 0.0, 6.0)
    # v3 = v1 * gate / 6  ->  fold the divide into a multiply by 1/6.
    o_ref[...] = (v1 * gate * jnp.float32(1.0 / 6.0)).astype(o_ref.dtype)


def model_forward(x, w, b, *, lane_tile=2048):
    """x: [B, in_f] f32, w: [out_f, in_f] f32, b: [out_f] f32 -> [B, out_f] f32."""
    B, in_f = x.shape
    out_f = w.shape[0]

    # Feature-major: put batch on the 128-lane axis. Pure layout plumbing;
    # if the caller can supply feature-major activations, these transposes
    # (and the alias temp) disappear entirely.
    x_t = jnp.transpose(x)                               # (in_f, B)

    # >= 2048 lanes per grid step amortizes the ~0.35 us/step overhead; fall
    # back to a single full-array block for small or ragged batches (VMEM is
    # never the binding constraint for this kernel on any TPU generation).
    if B >= lane_tile and B % lane_tile == 0:
        tb = lane_tile
    else:
        tb = B
    grid = (B // tb,)

    cost = pl.CostEstimate(
        flops=B * out_f * (2 * in_f + 5),
        transcendentals=0,
        bytes_accessed=4 * (x.size + w.size + b.size + B * out_f),
    )

    # x_t and the output have identical shape/dtype -> write in place.
    aliases = {2: 0} if in_f == out_f else {}

    out_t = pl.pallas_call(
        model_kernel,
        out_shape=jax.ShapeDtypeStruct((out_f, B), x.dtype),
        grid_spec=pltpu.PrefetchScalarGridSpec(
            num_scalar_prefetch=0,
            grid=grid,
            in_specs=[
                pl.BlockSpec(memory_space=pltpu.MemorySpace.SMEM),   # w: 4 floats
                pl.BlockSpec(memory_space=pltpu.MemorySpace.SMEM),   # b: 2 floats
                pl.BlockSpec((in_f, tb), lambda i: (0, i),
                             memory_space=pltpu.MemorySpace.VMEM),   # x_t
            ],
            out_specs=pl.BlockSpec((out_f, tb), lambda i: (0, i),
                                   memory_space=pltpu.MemorySpace.VMEM),
        ),
        compiler_params=pltpu.CompilerParams(
            dimension_semantics=("parallel",)),   # batch axis -> v7x megacore
        cost_estimate=cost,
        input_output_aliases=aliases,
    )(w, b, x_t)

    return jnp.transpose(out_t)                          # (B, out_f)


def reference_forward(x, w, b):
    v1 = x @ w.T + b[None, :]
    inner = jnp.minimum(0.0, jnp.maximum(6.0, v1 + 3.0))
    gate = jnp.clip(inner, 0.0, 6.0)
    return v1 * gate / 6.0


if __name__ == "__main__":
    key = jax.random.PRNGKey(0)
    kx, kw, kb, kxb = jax.random.split(key, 4)

    in_f, out_f = 2, 2

    # Deterministic parameter init mimicking nn.Linear(2, 2):
    # uniform(-1/sqrt(in_f), 1/sqrt(in_f)).
    bound = 1.0 / jnp.sqrt(jnp.float32(in_f))
    w = jax.random.uniform(kw, (out_f, in_f), jnp.float32, -bound, bound)
    b = jax.random.uniform(kb, (out_f,), jnp.float32, -bound, bound)

    fwd = jax.jit(model_forward)

    # Spec shape: x1 = torch.randn(1, 2).
    x = jax.random.normal(kx, (1, in_f), jnp.float32)
    out = jax.block_until_ready(fwd(x, w, b))
    ref = reference_forward(x, w, b)
    assert out.shape == (1, out_f)
    assert jnp.allclose(out, ref, atol=1e-5, rtol=1e-5)

    # Batched path: exercises the 2048-lane grid tiles + "parallel" batch axis.
    xb = jax.random.normal(kxb, (4096, in_f), jnp.float32)
    outb = jax.block_until_ready(fwd(xb, w, b))
    refb = reference_forward(xb, w, b)
    assert outb.shape == (4096, out_f)
    assert jnp.allclose(outb, refb, atol=1e-5, rtol=1e-5)

    print("KERNEL_OK")
</pallas_src>

<mosaic_0001>
module attributes {stable_mosaic.version = 11 : i64} {
  func.func @model_kernel(%arg0: i32, %arg1: memref<2x2xf32, #tpu.memory_space<smem>>, %arg2: memref<2xf32, #tpu.memory_space<smem>>, %arg3: memref<2x1xf32, #tpu.memory_space<vmem>>, %arg4: memref<2x1xf32, #tpu.memory_space<vmem>>) attributes {dimension_semantics = [#tpu.dimension_semantics<parallel>], iteration_bounds = array<i64: 1>, scalar_prefetch = 0 : i64, scratch_operands = 0 : i64, tpu.core_type = #tpu.core_type<tc>, window_params = [{transform_indices = @transform_0, window_bounds = array<i64: 2, 2>}, {transform_indices = @transform_1, window_bounds = array<i64: 2>}, {transform_indices = @transform_2, window_bounds = array<i64: 2, 1>}, {transform_indices = @transform_3, window_bounds = array<i64: 2, 1>}]} {
    %c0 = arith.constant 0 : index
    %c0_0 = arith.constant 0 : index
    %0 = vector.load %arg3[%c0, %c0_0] : memref<2x1xf32, #tpu.memory_space<vmem>>, vector<1x1xf32>
    %c1 = arith.constant 1 : index
    %c0_1 = arith.constant 0 : index
    %1 = vector.load %arg3[%c1, %c0_1] : memref<2x1xf32, #tpu.memory_space<vmem>>, vector<1x1xf32>
    %c0_2 = arith.constant 0 : index
    %c0_3 = arith.constant 0 : index
    %2 = memref.load %arg1[%c0_2, %c0_3] : memref<2x2xf32, #tpu.memory_space<smem>>
    %3 = vector.broadcast %2 : f32 to vector<1x1xf32>
    %4 = arith.mulf %0, %3 : vector<1x1xf32>
    %c0_4 = arith.constant 0 : index
    %c1_5 = arith.constant 1 : index
    %5 = memref.load %arg1[%c0_4, %c1_5] : memref<2x2xf32, #tpu.memory_space<smem>>
    %6 = vector.broadcast %5 : f32 to vector<1x1xf32>
    %7 = arith.mulf %1, %6 : vector<1x1xf32>
    %8 = arith.addf %4, %7 : vector<1x1xf32>
    %c0_6 = arith.constant 0 : index
    %9 = memref.load %arg2[%c0_6] : memref<2xf32, #tpu.memory_space<smem>>
    %10 = vector.broadcast %9 : f32 to vector<1x1xf32>
    %11 = arith.addf %8, %10 : vector<1x1xf32>
    %c1_7 = arith.constant 1 : index
    %c0_8 = arith.constant 0 : index
    %12 = memref.load %arg1[%c1_7, %c0_8] : memref<2x2xf32, #tpu.memory_space<smem>>
    %13 = vector.broadcast %12 : f32 to vector<1x1xf32>
    %14 = arith.mulf %0, %13 : vector<1x1xf32>
    %c1_9 = arith.constant 1 : index
    %c1_10 = arith.constant 1 : index
    %15 = memref.load %arg1[%c1_9, %c1_10] : memref<2x2xf32, #tpu.memory_space<smem>>
    %16 = vector.broadcast %15 : f32 to vector<1x1xf32>
    %17 = arith.mulf %1, %16 : vector<1x1xf32>
    %18 = arith.addf %14, %17 : vector<1x1xf32>
    %c1_11 = arith.constant 1 : index
    %19 = memref.load %arg2[%c1_11] : memref<2xf32, #tpu.memory_space<smem>>
    %20 = vector.broadcast %19 : f32 to vector<1x1xf32>
    %21 = arith.addf %18, %20 : vector<1x1xf32>
    %22 = tpu.concatenate %11, %21 in 0 : vector<1x1xf32>, vector<1x1xf32> -> vector<2x1xf32>
    %cst = arith.constant 3.000000e+00 : f32
    %23 = vector.broadcast %cst : f32 to vector<2x1xf32>
    %24 = arith.addf %22, %23 : vector<2x1xf32>
    %cst_12 = arith.constant 6.000000e+00 : f32
    %25 = vector.broadcast %cst_12 : f32 to vector<2x1xf32>
    %26 = arith.maximumf %25, %24 : vector<2x1xf32>
    %cst_13 = arith.constant 0.000000e+00 : f32
    %27 = vector.broadcast %cst_13 : f32 to vector<2x1xf32>
    %28 = arith.minimumf %27, %26 : vector<2x1xf32>
    %cst_14 = arith.constant 0.000000e+00 : f32
    %cst_15 = arith.constant 6.000000e+00 : f32
    %29 = vector.broadcast %cst_14 : f32 to vector<2x1xf32>
    %30 = arith.maximumf %29, %28 : vector<2x1xf32>
    %31 = vector.broadcast %cst_15 : f32 to vector<2x1xf32>
    %32 = arith.minimumf %31, %30 : vector<2x1xf32>
    %33 = arith.mulf %22, %32 : vector<2x1xf32>
    %cst_16 = arith.constant 0.166666672 : f32
    %34 = vector.broadcast %cst_16 : f32 to vector<2x1xf32>
    %35 = arith.mulf %33, %34 : vector<2x1xf32>
    %c0_17 = arith.constant 0 : index
    %c0_18 = arith.constant 0 : index
    %36 = vector.load %arg4[%c0_17, %c0_18] : memref<2x1xf32, #tpu.memory_space<vmem>>, vector<2x1xf32>
    tpu.vector_store %arg4[%c0_17, %c0_18], %35 {strides = array<i32>} : memref<2x1xf32, #tpu.memory_space<vmem>>, vector<2x1xf32>,
    return
  }
  func.func @transform_0(%arg0: i32) -> (i32, i32) {
    %c0_i32 = arith.constant 0 : i32
    %c0_i32_0 = arith.constant 0 : i32
    %c0_i32_1 = arith.constant 0 : i32
    return %c0_i32, %c0_i32_0 : i32, i32
  }
  func.func @transform_1(%arg0: i32) -> i32 {
    %c0_i32 = arith.constant 0 : i32
    %c0_i32_0 = arith.constant 0 : i32
    return %c0_i32 : i32
  }
  func.func @transform_2(%arg0: i32) -> (i32, i32) {
    %c0_i32 = arith.constant 0 : i32
    %c0_i32_0 = arith.constant 0 : i32
    return %c0_i32, %arg0 : i32, i32
  }
  func.func @transform_3(%arg0: i32) -> (i32, i32) {
    %c0_i32 = arith.constant 0 : i32
    %c0_i32_0 = arith.constant 0 : i32
    return %c0_i32, %arg0 : i32, i32
  }
}

</mosaic_0001>

<llo_original>
// kernel: model_forward.1
$region0: #{model_forward.1}
  #allocation0 [shape = 'u32[]', space=smem, size = 0x4, offset = 0x4, fixed_abs, tag = 'smem constant byte address 0x4 - core index']
  #allocation1 [shape = 'u32[144,128]{1,0:T(1,128)}', space=vmem, size = 0x12000, scoped, tag = 'internal scratch']
  %s0 = inlined_call_operand.vmem [shape: f32[2,2], index: 0, kind: input, shape index: {}]
  %s1 = inlined_call_operand.vmem [shape: f32[2], index: 1, kind: input, shape index: {}]
  %s2 = inlined_call_operand.vmem [shape: f32[2,1], index: 2, kind: input, shape index: {}, may-alias: {2,3}]
  %s3 = inlined_call_operand.vmem [shape: f32[2,1], index: 3, kind: output, shape index: {}, may-alias: {2,3}]
  %s4 = sld [smem:[#allocation0]]
  $region30: #{model_forward.1} parent=0
    _
  %s6 = ssub.s32 1, %s4
  %s7 = scalar_select 0, %s6, %s4
  $region1: #{model_forward.1} parent=0
    #allocation2 [shape = 'u8[1024]{0}', space=smem, size = 0x400, scoped, tag = 'input window, operand 0, single buffered']
    #allocation3 [shape = 's32[1]{0}', space=sflag, size = 0x4, scoped, tag = 'scoped memory for model_forward.1']
    #allocation4 [shape = 'u8[512]{0}', space=smem, size = 0x200, scoped, tag = 'input window, operand 1, single buffered']
    #allocation5 [shape = 's32[1]{0}', space=sflag, size = 0x4, scoped, tag = 'scoped memory for model_forward.1']
    %8 = vsyncpa [#allocation3], 0
    %9 = vsyncpa [#allocation5], 0
    // Predicated region
    $region2: #{model_forward.1} parent=1 // pred_check
      _
    $region3: #{model_forward.1} parent=1 // pred_check_branch
      %11 = sbr.rel (0) target = $region5
    $region4: #{model_forward.1} parent=1 // pred_region
      %s13 = ssub.s32 32, 32
      %14 = vsyncadd [#allocation3], %s13
      %s16 = sshll.u32 %s0, 4
      %s17 = int_to_ptr.vmem [resolvable:$true] %s16
      %19 = dma.vmem_to_smem %s17, 32, [#allocation2], [#allocation3]
    $region5: #{model_forward.1} parent=1 // pred_fallthru
      _
    // Predicated region
    $region6: #{model_forward.1} parent=1 // pred_check
      _
    $region7: #{model_forward.1} parent=1 // pred_check_branch
      %21 = sbr.rel (0) target = $region9
    $region8: #{model_forward.1} parent=1 // pred_region
      %s23 = ssub.s32 16, 16
      %24 = vsyncadd [#allocation5], %s23
      %s26 = sshll.u32 %s1, 4
      %s27 = int_to_ptr.vmem [resolvable:$true] %s26
      %29 = dma.vmem_to_smem %s27, 16, [#allocation4], [#allocation5]
    $region9: #{model_forward.1} parent=1 // pred_fallthru
      _
    // Predicated region
    $region10: #{model_forward.1} parent=1 // pred_check
      _
    $region11: #{model_forward.1} parent=1 // pred_check_branch
      %31 = sbr.rel (0) target = $region13
    $region12: #{model_forward.1} parent=1 // pred_region
      _
    $region13: #{model_forward.1} parent=1 // pred_fallthru
      _
    // Predicated region
    $region14: #{model_forward.1} parent=1 // pred_check
      _
    $region15: #{model_forward.1} parent=1 // pred_check_branch
      %33 = sbr.rel (0) target = $region17
    $region16: #{model_forward.1} parent=1 // pred_region
      %34 = dma.done [#allocation3], 32
    $region17: #{model_forward.1} parent=1 // pred_fallthru
      _
    // Predicated region
    $region18: #{model_forward.1} parent=1 // pred_check
      _
    $region19: #{model_forward.1} parent=1 // pred_check_branch
      %36 = sbr.rel (0) target = $region21
    $region20: #{model_forward.1} parent=1 // pred_region
      %37 = dma.done [#allocation5], 16
    $region21: #{model_forward.1} parent=1 // pred_fallthru
      _
    %38 = sfence
    %v39 = vld [vmem:[%s2] sm:$0x1]
    %v40 = vld [vmem:[%s2 + $0x1] sm:$0x1]
    %s41 = sld [smem:[#allocation2]]
    %v42 = vstv %s41
    %v43 = vmul.f32 %v39, %v42
    %s44 = sld [smem:[#allocation2 + $0x1]]
    %v45 = vstv %s44
    %v46 = vmul.f32 %v40, %v45
    %v47 = vadd.f32 %v43, %v46
    %s48 = sld [smem:[#allocation4]]
    %v49 = vstv %s48
    %v50 = vadd.f32 %v47, %v49
    %s51 = sld [smem:[#allocation2 + $0x80]]
    %v52 = vstv %s51
    %v53 = vmul.f32 %v39, %v52
    %s54 = sld [smem:[#allocation2 + $0x81]]
    %v55 = vstv %s54
    %v56 = vmul.f32 %v40, %v55
    %v57 = vadd.f32 %v53, %v56
    %s58 = sld [smem:[#allocation4 + $0x1]]
    %v59 = vstv %s58
    %v60 = vadd.f32 %v57, %v59
    %v62 = vrot.slane %v60, 7
    %vm64 = vcmask 1040384
    %v65 = vsel %vm64, %v50, %v62
    %v66 = vadd.f32 %v65, 3.0
    %v67 = vmax.f32 %v66, 6.0
    %v68 = vmin.f32 %v67, 0.0
    %v69 = vmax.f32 %v68, 0.0
    %v70 = vmin.f32 %v69, 6.0
    %v71 = vmul.f32 %v65, %v70
    %v72 = vmul.f32 %v71, 0.16666667
    %vm73 = vcmask 1024
    %74 = vst.msk [vmem:[%s3] sm:$0x3] %vm73, %v72
    // Predicated region
    $region22: #{model_forward.1} parent=1 // pred_check
      _
    $region23: #{model_forward.1} parent=1 // pred_check_branch
      %76 = sbr.rel (0) target = $region25
    $region24: #{model_forward.1} parent=1 // pred_region
      _
    $region25: #{model_forward.1} parent=1 // pred_fallthru
      _
    // Predicated region
    $region26: #{model_forward.1} parent=1 // pred_check
      _
    $region27: #{model_forward.1} parent=1 // pred_check_branch
      %78 = sbr.rel (0) target = $region29
    $region28: #{model_forward.1} parent=1 // pred_region
      _
    $region29: #{model_forward.1} parent=1 // pred_fallthru
      _
    %79 = vsyncpa [#allocation3], 1
    %80 = vsyncpa [#allocation5], 1

</llo_original>
